<compile_context>
chip_gen: v7x
topology: tpu7x:2x2x1
jax: 0.10.0
libtpu: 0.0.40
codegen_flags: <defaults>
</compile_context>

<pallas_src>
import functools

import jax
import jax.numpy as jnp
from jax.experimental import pallas as pl
from jax.experimental.pallas import tpu as pltpu

# Module-level dropout rates (globals in the original PyTorch script).
dropout1 = 0.2
dropout2 = 0.5


def _round_up(x, m):
    return (x + m - 1) // m * m


def _i32(c):
    """Reinterpret a 32-bit unsigned constant as a Python int32 value."""
    c &= 0xFFFFFFFF
    return c - (1 << 32) if c >= (1 << 31) else c


def _dropout_hash(shape, row0, seed):
    """Counter-based 32-bit hash over (global_row, col, seed).

    Pure int32 VPU ops (iota, mul, xor, logical shifts).  A single hash value
    feeds both dropout layers (different bytes), so the hash is computed once
    per tile over only the real hidden columns.
    """
    rows = row0 + jax.lax.broadcasted_iota(jnp.int32, shape, 0)
    cols = jax.lax.broadcasted_iota(jnp.int32, shape, 1)
    x = rows * jnp.int32(_i32(0x9E3779B9)) + cols
    x = x ^ (seed * jnp.int32(_i32(0x85EBCA6B)) + jnp.int32(_i32(0x68E31DA4)))
    # fmix32-style finalizer (logical shifts on int32).
    x = x ^ jax.lax.shift_right_logical(x, 16)
    x = x * jnp.int32(_i32(0x7FEB352D))
    x = x ^ jax.lax.shift_right_logical(x, 15)
    x = x * jnp.int32(_i32(0x846CA68B))
    x = x ^ jax.lax.shift_right_logical(x, 16)
    return x


def _keep_from_byte(bits, byte_idx, p):
    """Keep mask with P(keep) = round((1-p)*256)/256 taken from one hash byte."""
    thr = jnp.int32(int(round((1.0 - p) * 256.0)))
    b = jax.lax.shift_right_logical(bits, 8 * byte_idx) & jnp.int32(0xFF)
    return b < thr


def mlp_dropout_kernel(seed_ref, x_ref, w1_ref, b1_ref, w2_ref, b2_ref,
                       w3_ref, b3_ref, out_ref, *, tb, p1, p2, training):
    row0 = pl.program_id(0) * tb          # global row offset of this tile

    use1 = training and 0.0 < p1 < 1.0
    use2 = training and 0.0 < p2 < 1.0

    # Layer 1: Linear (bf16 operands, f32 accumulation) + ReLU.
    h1 = jnp.dot(x_ref[...], w1_ref[...], preferred_element_type=jnp.float32)
    h1 = jnp.maximum(h1 + b1_ref[...], 0.0)

    n1 = h1.shape[1]
    n2 = w2_ref.shape[1]
    if use1 or use2:
        nh = max(n1 if use1 else 0, n2 if use2 else 0)
        bits = _dropout_hash((h1.shape[0], nh), row0, seed_ref[0])

    # Dropout 1 (scale already folded into w2 on the host).
    if training and p1 >= 1.0:
        h1 = jnp.zeros_like(h1)
    elif use1:
        h1 = jnp.where(_keep_from_byte(bits[:, :n1], 0, p1), h1, 0.0)

    # Layer 2: Linear + ReLU.
    h2 = jnp.dot(h1.astype(w2_ref.dtype), w2_ref[...],
                 preferred_element_type=jnp.float32)
    h2 = jnp.maximum(h2 + b2_ref[...], 0.0)

    # Dropout 2 (scale folded into w3).
    if training and p2 >= 1.0:
        h2 = jnp.zeros_like(h2)
    elif use2:
        h2 = jnp.where(_keep_from_byte(bits[:, :n2], 1, p2), h2, 0.0)

    # Output layer: Linear (no activation, no dropout).
    out = jnp.dot(h2.astype(w3_ref.dtype), w3_ref[...],
                  preferred_element_type=jnp.float32)
    out_ref[...] = (out + b3_ref[...]).astype(out_ref.dtype)


def net_forward(x, params, seed, *, num_inputs, training=True, tile_rows=1024):
    """Pallas implementation of Net.forward."""
    p1, p2 = dropout1, dropout2
    w1, b1, w2, b2, w3, b3 = params

    x2 = x.reshape((-1, num_inputs))            # X.reshape((-1, num_inputs))
    batch = x2.shape[0]
    ni, nh1 = w1.shape
    nh2 = w2.shape[1]
    no = w3.shape[1]

    # Fold the 1/(1-p) inverted-dropout scale into the NEXT layer's weights
    # (training only) so the in-kernel dropout is a single select.
    w1f = jnp.asarray(w1, jnp.float32)
    w2f = jnp.asarray(w2, jnp.float32)
    w3f = jnp.asarray(w3, jnp.float32)
    if training:
        if 0.0 < p1 < 1.0:
            w2f = w2f * jnp.float32(1.0 / (1.0 - p1))
        if 0.0 < p2 < 1.0:
            w3f = w3f * jnp.float32(1.0 / (1.0 - p2))

    # bf16 MXU operands (f32 accumulation inside the kernel).
    xb = x2.astype(jnp.bfloat16)
    w1b = w1f.astype(jnp.bfloat16)
    w2b = w2f.astype(jnp.bfloat16)
    w3b = w3f.astype(jnp.bfloat16)
    b1f = jnp.asarray(b1, jnp.float32).reshape(1, nh1)
    b2f = jnp.asarray(b2, jnp.float32).reshape(1, nh2)
    b3f = jnp.asarray(b3, jnp.float32).reshape(1, no)

    # Row tiling: bf16-sublane aligned (16), capped at tile_rows, and split
    # into >= 2 grid steps when the batch allows it so ("parallel",) can use
    # both v7x TensorCores.
    pb = _round_up(batch, 16)
    tb = min(tile_rows, _round_up(-(-pb // 2), 16))
    pb = _round_up(pb, tb)
    if pb > batch:
        xb = jnp.pad(xb, ((0, pb - batch), (0, 0)))   # rows only; no column pad

    kernel = functools.partial(mlp_dropout_kernel, tb=tb, p1=p1, p2=p2,
                               training=training)

    flops = 2 * pb * (ni * nh1 + nh1 * nh2 + nh2 * no)
    bytes_accessed = (2 * pb * ni + 4 * pb * no
                      + 2 * (ni * nh1 + nh1 * nh2 + nh2 * no)
                      + 4 * (nh1 + nh2 + no))

    grid_spec = pltpu.PrefetchScalarGridSpec(
        num_scalar_prefetch=1,
        grid=(pb // tb,),
        in_specs=[
            # Unpadded feature dims: last block dim == full array dim is legal.
            pl.BlockSpec((tb, ni), lambda i, s: (i, 0)),     # x tile
            # Constant index_map -> weights/biases fetched once, VMEM-resident.
            pl.BlockSpec((ni, nh1), lambda i, s: (0, 0)),    # w1
            pl.BlockSpec((1, nh1), lambda i, s: (0, 0)),     # b1
            pl.BlockSpec((nh1, nh2), lambda i, s: (0, 0)),   # w2
            pl.BlockSpec((1, nh2), lambda i, s: (0, 0)),     # b2
            pl.BlockSpec((nh2, no), lambda i, s: (0, 0)),    # w3
            pl.BlockSpec((1, no), lambda i, s: (0, 0)),      # b3
        ],
        # Real-width output store: ~8x less HBM writeback than padding to 128.
        out_specs=pl.BlockSpec((tb, no), lambda i, s: (i, 0)),
    )

    out_full = pl.pallas_call(
        kernel,
        out_shape=jax.ShapeDtypeStruct((pb, no), jnp.float32),
        grid_spec=grid_spec,
        compiler_params=pltpu.CompilerParams(
            dimension_semantics=("parallel",)),
        cost_estimate=pl.CostEstimate(flops=flops, transcendentals=0,
                                      bytes_accessed=bytes_accessed),
    )(jnp.asarray([seed], jnp.int32), xb, w1b, b1f, w2b, b2f, w3b, b3f)

    return out_full[:batch]


def init_params(key, num_inputs, num_hiddens1, num_hiddens2, num_outputs):
    """Deterministic PyTorch-Linear-style init: U(-1/sqrt(fan_in), 1/sqrt(fan_in))."""
    def linear(k, fan_in, fan_out):
        kw, kb = jax.random.split(k)
        bound = 1.0 / jnp.sqrt(fan_in)
        w = jax.random.uniform(kw, (fan_in, fan_out), jnp.float32, -bound, bound)
        b = jax.random.uniform(kb, (1, fan_out), jnp.float32, -bound, bound)
        return w, b

    k1, k2, k3 = jax.random.split(key, 3)
    w1, b1 = linear(k1, num_inputs, num_hiddens1)
    w2, b2 = linear(k2, num_hiddens1, num_hiddens2)
    w3, b3 = linear(k3, num_hiddens2, num_outputs)
    return (w1, b1, w2, b2, w3, b3)


if __name__ == "__main__":
    num_inputs, num_hiddens1, num_hiddens2, num_outputs = 32, 64, 64, 16
    batch = 8

    key = jax.random.PRNGKey(0)
    kx, kp = jax.random.split(key)
    # Arbitrary leading shape; forward flattens to (-1, num_inputs).
    x = jax.random.normal(kx, (batch, 4, 8), dtype=jnp.float32)
    params = init_params(kp, num_inputs, num_hiddens1, num_hiddens2, num_outputs)

    # Training-mode forward (stochastic dropout masks).
    out = jax.block_until_ready(
        net_forward(x, params, seed=0, num_inputs=num_inputs, training=True))
    assert out.shape == (batch, num_outputs)
    assert bool(jnp.all(jnp.isfinite(out)))

    # Eval mode is deterministic: compare against a pure-JAX reference that
    # uses the same bf16-operand / f32-accumulation arithmetic as the kernel.
    out_eval = jax.block_until_ready(
        net_forward(x, params, seed=0, num_inputs=num_inputs, training=False))
    w1, b1, w2, b2, w3, b3 = params
    bf = jnp.bfloat16
    x2 = x.reshape((-1, num_inputs))
    h1 = jnp.maximum(jnp.dot(x2.astype(bf), w1.astype(bf),
                             preferred_element_type=jnp.float32) + b1, 0.0)
    h2 = jnp.maximum(jnp.dot(h1.astype(bf), w2.astype(bf),
                             preferred_element_type=jnp.float32) + b2, 0.0)
    ref = jnp.dot(h2.astype(bf), w3.astype(bf),
                  preferred_element_type=jnp.float32) + b3
    assert jnp.allclose(out_eval, ref, atol=1e-2, rtol=1e-2)

    print("KERNEL_OK")
</pallas_src>

<mosaic_0001>
module attributes {stable_mosaic.version = 11 : i64} {
  func.func @mlp_dropout_kernel(%arg0: i32, %arg1: memref<1xi32, #tpu.memory_space<smem>>, %arg2: memref<16x32xbf16, #tpu.memory_space<vmem>>, %arg3: memref<32x64xbf16, #tpu.memory_space<vmem>>, %arg4: memref<1x64xf32, #tpu.memory_space<vmem>>, %arg5: memref<64x64xbf16, #tpu.memory_space<vmem>>, %arg6: memref<1x64xf32, #tpu.memory_space<vmem>>, %arg7: memref<64x16xbf16, #tpu.memory_space<vmem>>, %arg8: memref<1x16xf32, #tpu.memory_space<vmem>>, %arg9: memref<16x16xf32, #tpu.memory_space<vmem>>) attributes {dimension_semantics = [#tpu.dimension_semantics<parallel>], iteration_bounds = array<i64: 1>, scalar_prefetch = 1 : i64, scratch_operands = 0 : i64, tpu.core_type = #tpu.core_type<tc>, window_params = [{transform_indices = @transform_0, window_bounds = array<i64: 16, 32>}, {pipeline_mode = #tpu.pipeline_mode<synchronous>, transform_indices = @transform_1, window_bounds = array<i64: 32, 64>}, {pipeline_mode = #tpu.pipeline_mode<synchronous>, transform_indices = @transform_2, window_bounds = array<i64: 1, 64>}, {pipeline_mode = #tpu.pipeline_mode<synchronous>, transform_indices = @transform_3, window_bounds = array<i64: 64, 64>}, {pipeline_mode = #tpu.pipeline_mode<synchronous>, transform_indices = @transform_4, window_bounds = array<i64: 1, 64>}, {pipeline_mode = #tpu.pipeline_mode<synchronous>, transform_indices = @transform_5, window_bounds = array<i64: 64, 16>}, {pipeline_mode = #tpu.pipeline_mode<synchronous>, transform_indices = @transform_6, window_bounds = array<i64: 1, 16>}, {transform_indices = @transform_7, window_bounds = array<i64: 16, 16>}]} {
    %c16_i32 = arith.constant 16 : i32
    %0 = arith.muli %arg0, %c16_i32 : i32
    %c0 = arith.constant 0 : index
    %c0_0 = arith.constant 0 : index
    %1 = vector.load %arg2[%c0, %c0_0] : memref<16x32xbf16, #tpu.memory_space<vmem>>, vector<16x32xbf16>
    %c0_1 = arith.constant 0 : index
    %c0_2 = arith.constant 0 : index
    %2 = vector.load %arg3[%c0_1, %c0_2] : memref<32x64xbf16, #tpu.memory_space<vmem>>, vector<32x64xbf16>
    %cst = arith.constant dense<0.000000e+00> : vector<16x64xf32>
    %3 = tpu.matmul %1, %2, %cst {dimension_numbers = #tpu.dot_dimension_numbers<[1], [0], [0], [1], [0, 0, 1, 1], [], []>} : vector<16x32xbf16>, vector<32x64xbf16>, vector<16x64xf32> -> vector<16x64xf32>
    %c0_3 = arith.constant 0 : index
    %c0_4 = arith.constant 0 : index
    %4 = vector.load %arg4[%c0_3, %c0_4] : memref<1x64xf32, #tpu.memory_space<vmem>>, vector<1x64xf32>
    %5 = vector.broadcast %4 : vector<1x64xf32> to vector<16x64xf32>
    %6 = arith.addf %3, %5 : vector<16x64xf32>
    %cst_5 = arith.constant 0.000000e+00 : f32
    %7 = vector.broadcast %cst_5 : f32 to vector<16x64xf32>
    %8 = arith.maximumf %6, %7 : vector<16x64xf32>
    %c0_6 = arith.constant 0 : index
    %9 = memref.load %arg1[%c0_6] : memref<1xi32, #tpu.memory_space<smem>>
    %10 = tpu.iota {dimensions = array<i32: 0>} : vector<16x64xi32>
    %11 = vector.broadcast %0 : i32 to vector<16x64xi32>
    %12 = arith.addi %11, %10 : vector<16x64xi32>
    %13 = tpu.iota {dimensions = array<i32: 1>} : vector<16x64xi32>
    %c-1640531527_i32 = arith.constant -1640531527 : i32
    %14 = vector.broadcast %c-1640531527_i32 : i32 to vector<16x64xi32>
    %15 = arith.muli %12, %14 : vector<16x64xi32>
    %16 = arith.addi %15, %13 : vector<16x64xi32>
    %c-2048144789_i32 = arith.constant -2048144789 : i32
    %17 = arith.muli %9, %c-2048144789_i32 : i32
    %c1759714724_i32 = arith.constant 1759714724 : i32
    %18 = arith.addi %17, %c1759714724_i32 : i32
    %19 = vector.broadcast %18 : i32 to vector<16x64xi32>
    %20 = arith.xori %16, %19 : vector<16x64xi32>
    %c16_i32_7 = arith.constant 16 : i32
    %21 = vector.broadcast %c16_i32_7 : i32 to vector<16x64xi32>
    %22 = arith.shrui %20, %21 : vector<16x64xi32>
    %23 = arith.xori %20, %22 : vector<16x64xi32>
    %c2146121005_i32 = arith.constant 2146121005 : i32
    %24 = vector.broadcast %c2146121005_i32 : i32 to vector<16x64xi32>
    %25 = arith.muli %23, %24 : vector<16x64xi32>
    %c15_i32 = arith.constant 15 : i32
    %26 = vector.broadcast %c15_i32 : i32 to vector<16x64xi32>
    %27 = arith.shrui %25, %26 : vector<16x64xi32>
    %28 = arith.xori %25, %27 : vector<16x64xi32>
    %c-2073254261_i32 = arith.constant -2073254261 : i32
    %29 = vector.broadcast %c-2073254261_i32 : i32 to vector<16x64xi32>
    %30 = arith.muli %28, %29 : vector<16x64xi32>
    %c16_i32_8 = arith.constant 16 : i32
    %31 = vector.broadcast %c16_i32_8 : i32 to vector<16x64xi32>
    %32 = arith.shrui %30, %31 : vector<16x64xi32>
    %33 = arith.xori %30, %32 : vector<16x64xi32>
    %c0_i32 = arith.constant 0 : i32
    %34 = vector.broadcast %c0_i32 : i32 to vector<16x64xi32>
    %35 = arith.shrui %33, %34 : vector<16x64xi32>
    %c255_i32 = arith.constant 255 : i32
    %36 = vector.broadcast %c255_i32 : i32 to vector<16x64xi32>
    %37 = arith.andi %35, %36 : vector<16x64xi32>
    %c205_i32 = arith.constant 205 : i32
    %38 = vector.broadcast %c205_i32 : i32 to vector<16x64xi32>
    %39 = arith.cmpi slt, %37, %38 : vector<16x64xi32>
    %cst_9 = arith.constant 0.000000e+00 : f32
    %40 = vector.broadcast %cst_9 : f32 to vector<16x64xf32>
    %41 = arith.select %39, %8, %40 : vector<16x64xi1>, vector<16x64xf32>
    %42 = arith.truncf %41 : vector<16x64xf32> to vector<16x64xbf16>
    %c0_10 = arith.constant 0 : index
    %c0_11 = arith.constant 0 : index
    %43 = vector.load %arg5[%c0_10, %c0_11] : memref<64x64xbf16, #tpu.memory_space<vmem>>, vector<64x64xbf16>
    %cst_12 = arith.constant dense<0.000000e+00> : vector<16x64xf32>
    %44 = tpu.matmul %42, %43, %cst_12 {dimension_numbers = #tpu.dot_dimension_numbers<[1], [0], [0], [1], [0, 0, 1, 1], [], []>} : vector<16x64xbf16>, vector<64x64xbf16>, vector<16x64xf32> -> vector<16x64xf32>
    %c0_13 = arith.constant 0 : index
    %c0_14 = arith.constant 0 : index
    %45 = vector.load %arg6[%c0_13, %c0_14] : memref<1x64xf32, #tpu.memory_space<vmem>>, vector<1x64xf32>
    %46 = vector.broadcast %45 : vector<1x64xf32> to vector<16x64xf32>
    %47 = arith.addf %44, %46 : vector<16x64xf32>
    %cst_15 = arith.constant 0.000000e+00 : f32
    %48 = vector.broadcast %cst_15 : f32 to vector<16x64xf32>
    %49 = arith.maximumf %47, %48 : vector<16x64xf32>
    %c8_i32 = arith.constant 8 : i32
    %50 = vector.broadcast %c8_i32 : i32 to vector<16x64xi32>
    %51 = arith.shrui %33, %50 : vector<16x64xi32>
    %c255_i32_16 = arith.constant 255 : i32
    %52 = vector.broadcast %c255_i32_16 : i32 to vector<16x64xi32>
    %53 = arith.andi %51, %52 : vector<16x64xi32>
    %c128_i32 = arith.constant 128 : i32
    %54 = vector.broadcast %c128_i32 : i32 to vector<16x64xi32>
    %55 = arith.cmpi slt, %53, %54 : vector<16x64xi32>
    %cst_17 = arith.constant 0.000000e+00 : f32
    %56 = vector.broadcast %cst_17 : f32 to vector<16x64xf32>
    %57 = arith.select %55, %49, %56 : vector<16x64xi1>, vector<16x64xf32>
    %58 = arith.truncf %57 : vector<16x64xf32> to vector<16x64xbf16>
    %c0_18 = arith.constant 0 : index
    %c0_19 = arith.constant 0 : index
    %59 = vector.load %arg7[%c0_18, %c0_19] : memref<64x16xbf16, #tpu.memory_space<vmem>>, vector<64x16xbf16>
    %cst_20 = arith.constant dense<0.000000e+00> : vector<16x16xf32>
    %60 = tpu.matmul %58, %59, %cst_20 {dimension_numbers = #tpu.dot_dimension_numbers<[1], [0], [0], [1], [0, 0, 1, 1], [], []>} : vector<16x64xbf16>, vector<64x16xbf16>, vector<16x16xf32> -> vector<16x16xf32>
    %c0_21 = arith.constant 0 : index
    %c0_22 = arith.constant 0 : index
    %61 = vector.load %arg8[%c0_21, %c0_22] : memref<1x16xf32, #tpu.memory_space<vmem>>, vector<1x16xf32>
    %62 = vector.broadcast %61 : vector<1x16xf32> to vector<16x16xf32>
    %63 = arith.addf %60, %62 : vector<16x16xf32>
    %c0_23 = arith.constant 0 : index
    %c0_24 = arith.constant 0 : index
    %64 = vector.load %arg9[%c0_23, %c0_24] : memref<16x16xf32, #tpu.memory_space<vmem>>, vector<16x16xf32>
    tpu.vector_store %arg9[%c0_23, %c0_24], %63 {strides = array<i32>} : memref<16x16xf32, #tpu.memory_space<vmem>>, vector<16x16xf32>,
    return
  }
  func.func @transform_0(%arg0: i32, %arg1: memref<1xi32, #tpu.memory_space<smem>>) -> (i32, i32) {
    %c0_i32 = arith.constant 0 : i32
    %c0_i32_0 = arith.constant 0 : i32
    return %arg0, %c0_i32 : i32, i32
  }
  func.func @transform_1(%arg0: i32, %arg1: memref<1xi32, #tpu.memory_space<smem>>) -> (i32, i32) {
    %c0_i32 = arith.constant 0 : i32
    %c0_i32_0 = arith.constant 0 : i32
    %c0_i32_1 = arith.constant 0 : i32
    return %c0_i32, %c0_i32_0 : i32, i32
  }
  func.func @transform_2(%arg0: i32, %arg1: memref<1xi32, #tpu.memory_space<smem>>) -> (i32, i32) {
    %c0_i32 = arith.constant 0 : i32
    %c0_i32_0 = arith.constant 0 : i32
    %c0_i32_1 = arith.constant 0 : i32
    return %c0_i32, %c0_i32_0 : i32, i32
  }
  func.func @transform_3(%arg0: i32, %arg1: memref<1xi32, #tpu.memory_space<smem>>) -> (i32, i32) {
    %c0_i32 = arith.constant 0 : i32
    %c0_i32_0 = arith.constant 0 : i32
    %c0_i32_1 = arith.constant 0 : i32
    return %c0_i32, %c0_i32_0 : i32, i32
  }
  func.func @transform_4(%arg0: i32, %arg1: memref<1xi32, #tpu.memory_space<smem>>) -> (i32, i32) {
    %c0_i32 = arith.constant 0 : i32
    %c0_i32_0 = arith.constant 0 : i32
    %c0_i32_1 = arith.constant 0 : i32
    return %c0_i32, %c0_i32_0 : i32, i32
  }
  func.func @transform_5(%arg0: i32, %arg1: memref<1xi32, #tpu.memory_space<smem>>) -> (i32, i32) {
    %c0_i32 = arith.constant 0 : i32
    %c0_i32_0 = arith.constant 0 : i32
    %c0_i32_1 = arith.constant 0 : i32
    return %c0_i32, %c0_i32_0 : i32, i32
  }
  func.func @transform_6(%arg0: i32, %arg1: memref<1xi32, #tpu.memory_space<smem>>) -> (i32, i32) {
    %c0_i32 = arith.constant 0 : i32
    %c0_i32_0 = arith.constant 0 : i32
    %c0_i32_1 = arith.constant 0 : i32
    return %c0_i32, %c0_i32_0 : i32, i32
  }
  func.func @transform_7(%arg0: i32, %arg1: memref<1xi32, #tpu.memory_space<smem>>) -> (i32, i32) {
    %c0_i32 = arith.constant 0 : i32
    %c0_i32_0 = arith.constant 0 : i32
    return %arg0, %c0_i32 : i32, i32
  }
}

</mosaic_0001>

<llo_original>
// kernel: tpu_custom_call.1
$region0: #{tpu_custom_call.1}
  #allocation0 [shape = 'u32[]', space=smem, size = 0x4, offset = 0x4, fixed_abs, tag = 'smem constant byte address 0x4 - core index']
  #allocation1 [shape = 'u32[144,128]{1,0:T(1,128)}', space=vmem, size = 0x12000, scoped, tag = 'internal scratch']
  #allocation2 [shape = 's32[1]{0}', space=sflag, size = 0x4, scoped, tag = 'scoped memory for tpu_custom_call.1']
  #allocation3 [shape = 's32[1]{0:T(128)S(6)}', space=smem, size = 0x200, scoped, tag = 'prefetched SMEM operand 0']
  %s0 = inlined_call_operand.<no memory space> [shape: s32[1], index: 0, kind: input, shape index: {}]
  %s1 = inlined_call_operand.hbm [shape: bf16[16,32], index: 1, kind: input, shape index: {}]
  %s2 = inlined_call_operand.vmem [shape: bf16[32,64], index: 2, kind: input, shape index: {}]
  %s3 = inlined_call_operand.vmem [shape: f32[1,64], index: 3, kind: input, shape index: {}]
  %s4 = inlined_call_operand.vmem [shape: bf16[64,64], index: 4, kind: input, shape index: {}]
  %s5 = inlined_call_operand.vmem [shape: f32[1,64], index: 5, kind: input, shape index: {}]
  %s6 = inlined_call_operand.vmem [shape: bf16[64,16], index: 6, kind: input, shape index: {}]
  %s7 = inlined_call_operand.vmem [shape: f32[1,16], index: 7, kind: input, shape index: {}]
  %s8 = inlined_call_operand.hbm [shape: f32[16,16], index: 8, kind: output, shape index: {}]
  %s9 = sld [smem:[#allocation0]]
  $region42: #{tpu_custom_call.1} parent=0
    _
  %s11 = ssub.s32 1, %s9
  %s12 = scalar_select 0, %s11, %s9
  %13 = sst [smem:[#allocation3]] %s0
  $region1: #{tpu_custom_call.1} parent=0
    #allocation4 [shape = 'u8[4096]{0}', space=vmem, size = 0x1000, scoped, tag = 'input window, operand 1, single buffered']
    #allocation5 [shape = 's32[1]{0}', space=sflag, size = 0x4, scoped, tag = 'scoped memory for tpu_custom_call.1']
    #allocation6 [shape = 's32[1]{0}', space=sflag, size = 0x4, scoped, tag = 'scoped memory for tpu_custom_call.1']
    #allocation7 [shape = 'u8[8192]{0}', space=vmem, size = 0x2000, scoped, tag = 'output window, operand 0, single buffered']
    %14 = vsyncpa [#allocation5], 0
    %15 = vsyncpa [#allocation6], 0
    // Predicated region
    $region2: #{tpu_custom_call.1} parent=1 // pred_check
      _
    $region3: #{tpu_custom_call.1} parent=1 // pred_check_branch
      %17 = sbr.rel (0) target = $region5
    $region4: #{tpu_custom_call.1} parent=1 // pred_region
      %s19 = ssub.s32 128, 128
      %20 = vsyncadd [#allocation5], %s19
      %s21 = sshll.u32 [#allocation4], 4
      %s22 = int_to_ptr.vmem [resolvable:$true] %s21
      %27 = dma.hbm_to_vmem [thread:$0]  %s1, 128, %s22, [#allocation5], 64, 64, 4
    $region5: #{tpu_custom_call.1} parent=1 // pred_fallthru
      _
    // Predicated region
    $region6: #{tpu_custom_call.1} parent=1 // pred_check
      _
    $region7: #{tpu_custom_call.1} parent=1 // pred_check_branch
      %29 = sbr.rel (0) target = $region9
    $region8: #{tpu_custom_call.1} parent=1 // pred_region
      _
    $region9: #{tpu_custom_call.1} parent=1 // pred_fallthru
      _
    // Predicated region
    $region10: #{tpu_custom_call.1} parent=1 // pred_check
      _
    $region11: #{tpu_custom_call.1} parent=1 // pred_check_branch
      %31 = sbr.rel (0) target = $region13
    $region12: #{tpu_custom_call.1} parent=1 // pred_region
      _
    $region13: #{tpu_custom_call.1} parent=1 // pred_fallthru
      _
    // Predicated region
    $region14: #{tpu_custom_call.1} parent=1 // pred_check
      _
    $region15: #{tpu_custom_call.1} parent=1 // pred_check_branch
      %33 = sbr.rel (0) target = $region17
    $region16: #{tpu_custom_call.1} parent=1 // pred_region
      _
    $region17: #{tpu_custom_call.1} parent=1 // pred_fallthru
      _
    // Predicated region
    $region18: #{tpu_custom_call.1} parent=1 // pred_check
      _
    $region19: #{tpu_custom_call.1} parent=1 // pred_check_branch
      %35 = sbr.rel (0) target = $region21
    $region20: #{tpu_custom_call.1} parent=1 // pred_region
      _
    $region21: #{tpu_custom_call.1} parent=1 // pred_fallthru
      _
    // Predicated region
    $region22: #{tpu_custom_call.1} parent=1 // pred_check
      _
    $region23: #{tpu_custom_call.1} parent=1 // pred_check_branch
      %37 = sbr.rel (0) target = $region25
    $region24: #{tpu_custom_call.1} parent=1 // pred_region
      _
    $region25: #{tpu_custom_call.1} parent=1 // pred_fallthru
      _
    // Predicated region
    $region26: #{tpu_custom_call.1} parent=1 // pred_check
      _
    $region27: #{tpu_custom_call.1} parent=1 // pred_check_branch
      %39 = sbr.rel (0) target = $region29
    $region28: #{tpu_custom_call.1} parent=1 // pred_region
      _
    $region29: #{tpu_custom_call.1} parent=1 // pred_fallthru
      _
    // Predicated region
    $region30: #{tpu_custom_call.1} parent=1 // pred_check
      _
    $region31: #{tpu_custom_call.1} parent=1 // pred_check_branch
      %41 = sbr.rel (0) target = $region33
    $region32: #{tpu_custom_call.1} parent=1 // pred_region
      %42 = dma.done [#allocation5], 128
    $region33: #{tpu_custom_call.1} parent=1 // pred_fallthru
      _
    %s44 = smul.u32 0, 16
    %v45 = vld [vmem:[#allocation4] sm:$0xf]
    %v46 = vld [vmem:[#allocation4 + $0x4] sm:$0xf]
    %v47 = vld [vmem:[%s2] sm:$0xf]
    %v48 = vld [vmem:[%s2 + $0x4] sm:$0xf]
    %v49 = vld [vmem:[%s2 + $0x8] sm:$0xf]
    %v50 = vld [vmem:[%s2 + $0xc] sm:$0xf]
    %v51 = vld [vmem:[%s3] sm:$0x1]
    %v53 = vlaneseq
    %v54 = vshrl.u32 %v53, 7
    %v55 = vsub.s32 0, %v54
    %v56 = vrot.slane %v51, %v55
    %v60 = vunpack.c.l.b16 %v45
    %v61 = vunpack.c.l.b16 %v46
    %v62 = vpack.c.b16 %v61, %v60
    %v67 = vunpack.c.l.b16 %v47
    %v68 = vunpack.c.l.b16 %v48
    %v69 = vunpack.c.l.b16 %v49
    %v70 = vunpack.c.l.b16 %v50
    %v71 = vpack.c.b16 %v68, %v67
    %v72 = vpack.c.b16 %v70, %v69
    %vm75 = vcmask 261120
    %v77 = vsel %vm75, %v62, 0
    %79 = vmatprep.subr.bf16.mxu0 0
    %80 = vmatpush1.bf16.msra.mxu0 %v71
    %81 = vmatprep.subr.bf16.mxu0 0
    %82 = vmatpush1.bf16.msra.mxu0 %v72
    %83 = vmatprep.subr.bf16.mxu0 0
    %84 = vmatpush1.bf16.msra.mxu0 0
    %85 = vmatprep.subr.bf16.mxu0 0
    %86 = vmatpush1.bf16.msra.mxu0 0
    %87 = vmatprep.subr.bf16.mxu0 0
    %88 = vmatpush1.bf16.msra.mxu0 0
    %89 = vmatprep.subr.bf16.mxu0 0
    %90 = vmatpush1.bf16.msra.mxu0 0
    %91 = vmatprep.subr.bf16.mxu0 0
    %92 = vmatpush1.bf16.msra.mxu0 0
    %93 = vmatprep.subr.bf16.mxu0 0
    %94 = vmatpush1.bf16.msra.mxu0 0
    %95 = vmatprep.subr.bf16.mxu0 0
    %96 = vmatpush1.bf16.msra.mxu0 0
    %97 = vmatprep.subr.bf16.mxu0 0
    %98 = vmatpush1.bf16.msra.mxu0 0
    %99 = vmatprep.subr.bf16.mxu0 0
    %100 = vmatpush1.bf16.msra.mxu0 0
    %101 = vmatprep.subr.bf16.mxu0 0
    %102 = vmatpush1.bf16.msra.mxu0 0
    %103 = vmatprep.subr.bf16.mxu0 0
    %104 = vmatpush1.bf16.msra.mxu0 0
    %105 = vmatprep.subr.bf16.mxu0 0
    %106 = vmatpush1.bf16.msra.mxu0 0
    %107 = vmatprep.subr.bf16.mxu0 0
    %108 = vmatpush1.bf16.msra.mxu0 0
    %109 = vmatprep.subr.bf16.mxu0 0
    %110 = vmatpush1.bf16.msra.mxu0 0
    %111 = vmatprep.mubr.bf16.mxu0 0
    %112 = vmatmul.mubr.bf16.gmra.mrb[0].mxu0 %v77
    %v113 = vpop.f32.mrb[0].mxu0
    %v114 = vadd.f32 %v56, %v113
    %v115 = vpop.f32.mrb[0].mxu0
    %v116 = vpop.f32.mrb[0].mxu0
    %v117 = vadd.f32 %v56, %v116
    %v118 = vpop.f32.mrb[0].mxu0
    %119 = vdwg.mxu0
    %v120 = vmax.f32 %v114, 0.0
    %v121 = vmax.f32 %v117, 0.0
    %s122 = sld [smem:[#allocation3]]
    %v123 = vlaneseq
    %v124 = vshrl.u32 %v123, 7
    %v125 = vadd.s32 %v124, 8
    %v126 = vstv %s44
    %v127 = vadd.s32 %v126, %v124
    %v128 = vadd.s32 %v126, %v125
    %v129 = vlaneseq
    %v130 = vand.u32 %v129, 127
    %v131 = vmul.u32 %v127, 2654435769
    %v132 = vmul.u32 %v128, 2654435769
    %v133 = vadd.s32 %v131, %v130
    %v134 = vadd.s32 %v132, %v130
    %s135 = smul.u32 %s122, 2246822507
    %s136 = sadd.s32 %s135, 1759714724
    %v137 = vstv %s136
    %v138 = vxor.u32 %v133, %v137
    %v139 = vxor.u32 %v134, %v137
    %v140 = vshrl.u32 %v138, 16
    %v141 = vshrl.u32 %v139, 16
    %v142 = vxor.u32 %v138, %v140
    %v143 = vxor.u32 %v139, %v141
    %v144 = vmul.u32 %v142, 2146121005
    %v145 = vmul.u32 %v143, 2146121005
    %v146 = vshrl.u32 %v144, 15
    %v147 = vshrl.u32 %v145, 15
    %v148 = vxor.u32 %v144, %v146
    %v149 = vxor.u32 %v145, %v147
    %v150 = vmul.u32 %v148, 2221713035
    %v151 = vmul.u32 %v149, 2221713035
    %v152 = vshrl.u32 %v150, 16
    %v153 = vshrl.u32 %v151, 16
    %v154 = vxor.u32 %v150, %v152
    %v155 = vxor.u32 %v151, %v153
    %v156 = vand.u32 %v154, 255
    %v157 = vand.u32 %v155, 255
    %vm158 = vcmp.lt.s32.totalorder %v156, 205
    %vm159 = vcmp.lt.s32.totalorder %v157, 205
    %v160 = vsel %vm158, %v120, 0.0
    %v161 = vsel %vm159, %v121, 0.0
    %v162 = vpack.c.bf16 %v161, %v160
    %v163 = vld [vmem:[%s4] sm:$0xf]
    %v164 = vld [vmem:[%s4 + $0x4] sm:$0xf]
    %v165 = vld [vmem:[%s4 + $0x8] sm:$0xf]
    %v166 = vld [vmem:[%s4 + $0xc] sm:$0xf]
    %v167 = vld [vmem:[%s4 + $0x10] sm:$0xf]
    %v168 = vld [vmem:[%s4 + $0x14] sm:$0xf]
    %v169 = vld [vmem:[%s4 + $0x18] sm:$0xf]
    %v170 = vld [vmem:[%s4 + $0x1c] sm:$0xf]
    %v171 = vld [vmem:[%s5] sm:$0x1]
    %v173 = vlaneseq
    %v174 = vshrl.u32 %v173, 7
    %v175 = vsub.s32 0, %v174
    %v176 = vrot.slane %v171, %v175
    %v186 = vunpack.c.l.b16 %v163
    %v187 = vunpack.c.l.b16 %v164
    %v188 = vunpack.c.l.b16 %v165
    %v189 = vunpack.c.l.b16 %v166
    %v190 = vunpack.c.l.b16 %v167
    %v191 = vunpack.c.l.b16 %v168
    %v192 = vunpack.c.l.b16 %v169
    %v193 = vunpack.c.l.b16 %v170
    %v194 = vpack.c.b16 %v187, %v186
    %v195 = vpack.c.b16 %v189, %v188
    %v196 = vpack.c.b16 %v191, %v190
    %v197 = vpack.c.b16 %v193, %v192
    %vm202 = vcmask 523264
    %v204 = vsel %vm202, %v162, 0
    %206 = vmatprep.subr.bf16.mxu0 0
    %207 = vmatpush1.bf16.msra.mxu0 %v194
    %208 = vmatprep.subr.bf16.mxu0 0
    %209 = vmatpush1.bf16.msra.mxu0 %v195
    %210 = vmatprep.subr.bf16.mxu0 0
    %211 = vmatpush1.bf16.msra.mxu0 %v196
    %212 = vmatprep.subr.bf16.mxu0 0
    %213 = vmatpush1.bf16.msra.mxu0 %v197
    %214 = vmatprep.subr.bf16.mxu0 0
    %215 = vmatpush1.bf16.msra.mxu0 0
    %216 = vmatprep.subr.bf16.mxu0 0
    %217 = vmatpush1.bf16.msra.mxu0 0
    %218 = vmatprep.subr.bf16.mxu0 0
    %219 = vmatpush1.bf16.msra.mxu0 0
    %220 = vmatprep.subr.bf16.mxu0 0
    %221 = vmatpush1.bf16.msra.mxu0 0
    %222 = vmatprep.subr.bf16.mxu0 0
    %223 = vmatpush1.bf16.msra.mxu0 0
    %224 = vmatprep.subr.bf16.mxu0 0
    %225 = vmatpush1.bf16.msra.mxu0 0
    %226 = vmatprep.subr.bf16.mxu0 0
    %227 = vmatpush1.bf16.msra.mxu0 0
    %228 = vmatprep.subr.bf16.mxu0 0
    %229 = vmatpush1.bf16.msra.mxu0 0
    %230 = vmatprep.subr.bf16.mxu0 0
    %231 = vmatpush1.bf16.msra.mxu0 0
    %232 = vmatprep.subr.bf16.mxu0 0
    %233 = vmatpush1.bf16.msra.mxu0 0
    %234 = vmatprep.subr.bf16.mxu0 0
    %235 = vmatpush1.bf16.msra.mxu0 0
    %236 = vmatprep.subr.bf16.mxu0 0
    %237 = vmatpush1.bf16.msra.mxu0 0
    %238 = vmatprep.mubr.bf16.mxu0 0
    %239 = vmatmul.mubr.bf16.gmra.mrb[0].mxu0 %v204
    %v240 = vpop.f32.mrb[0].mxu0
    %v241 = vadd.f32 %v176, %v240
    %v242 = vpop.f32.mrb[0].mxu0
    %v243 = vpop.f32.mrb[0].mxu0
    %v244 = vadd.f32 %v176, %v243
    %v245 = vpop.f32.mrb[0].mxu0
    %246 = vdwg.mxu0
    %v247 = vmax.f32 %v241, 0.0
    %v248 = vmax.f32 %v244, 0.0
    %v249 = vshrl.u32 %v154, 8
    %v250 = vshrl.u32 %v155, 8
    %v251 = vand.u32 %v249, 255
    %v252 = vand.u32 %v250, 255
    %vm253 = vcmp.lt.s32.totalorder %v251, 128
    %vm254 = vcmp.lt.s32.totalorder %v252, 128
    %v255 = vsel %vm253, %v247, 0.0
    %v256 = vsel %vm254, %v248, 0.0
    %v257 = vpack.c.bf16 %v256, %v255
    %v258 = vld [vmem:[%s6] sm:$0xf]
    %v259 = vld [vmem:[%s6 + $0x4] sm:$0xf]
    %v260 = vld [vmem:[%s6 + $0x8] sm:$0xf]
    %v261 = vld [vmem:[%s6 + $0xc] sm:$0xf]
    %v262 = vld [vmem:[%s6 + $0x10] sm:$0xf]
    %v263 = vld [vmem:[%s6 + $0x14] sm:$0xf]
    %v264 = vld [vmem:[%s6 + $0x18] sm:$0xf]
    %v265 = vld [vmem:[%s6 + $0x1c] sm:$0xf]
    %v266 = vld [vmem:[%s7] sm:$0x1]
    %v268 = vlaneseq
    %v269 = vshrl.u32 %v268, 7
    %v270 = vsub.s32 0, %v269
    %v271 = vrot.slane %v266, %v270
    %v281 = vunpack.c.l.b16 %v258
    %v282 = vunpack.c.l.b16 %v259
    %v283 = vunpack.c.l.b16 %v260
    %v284 = vunpack.c.l.b16 %v261
    %v285 = vunpack.c.l.b16 %v262
    %v286 = vunpack.c.l.b16 %v263
    %v287 = vunpack.c.l.b16 %v264
    %v288 = vunpack.c.l.b16 %v265
    %v289 = vpack.c.b16 %v282, %v281
    %v290 = vpack.c.b16 %v284, %v283
    %v291 = vpack.c.b16 %v286, %v285
    %v292 = vpack.c.b16 %v288, %v287
    %v298 = vsel %vm202, %v257, 0
    %300 = vmatprep.subr.bf16.mxu0 0
    %301 = vmatpush1.bf16.msra.mxu0 %v289
    %302 = vmatprep.subr.bf16.mxu0 0
    %303 = vmatpush1.bf16.msra.mxu0 %v290
    %304 = vmatprep.subr.bf16.mxu0 0
    %305 = vmatpush1.bf16.msra.mxu0 %v291
    %306 = vmatprep.subr.bf16.mxu0 0
    %307 = vmatpush1.bf16.msra.mxu0 %v292
    %308 = vmatprep.subr.bf16.mxu0 0
    %309 = vmatpush1.bf16.msra.mxu0 0
    %310 = vmatprep.subr.bf16.mxu0 0
    %311 = vmatpush1.bf16.msra.mxu0 0
    %312 = vmatprep.subr.bf16.mxu0 0
    %313 = vmatpush1.bf16.msra.mxu0 0
    %314 = vmatprep.subr.bf16.mxu0 0
    %315 = vmatpush1.bf16.msra.mxu0 0
    %316 = vmatprep.subr.bf16.mxu0 0
    %317 = vmatpush1.bf16.msra.mxu0 0
    %318 = vmatprep.subr.bf16.mxu0 0
    %319 = vmatpush1.bf16.msra.mxu0 0
    %320 = vmatprep.subr.bf16.mxu0 0
    %321 = vmatpush1.bf16.msra.mxu0 0
    %322 = vmatprep.subr.bf16.mxu0 0
    %323 = vmatpush1.bf16.msra.mxu0 0
    %324 = vmatprep.subr.bf16.mxu0 0
    %325 = vmatpush1.bf16.msra.mxu0 0
    %326 = vmatprep.subr.bf16.mxu0 0
    %327 = vmatpush1.bf16.msra.mxu0 0
    %328 = vmatprep.subr.bf16.mxu0 0
    %329 = vmatpush1.bf16.msra.mxu0 0
    %330 = vmatprep.subr.bf16.mxu0 0
    %331 = vmatpush1.bf16.msra.mxu0 0
    %332 = vmatprep.mubr.bf16.mxu0 0
    %333 = vmatmul.mubr.bf16.gmra.mrb[0].mxu0 %v298
    %v334 = vpop.f32.mrb[0].mxu0
    %v335 = vadd.f32 %v271, %v334
    %v336 = vpop.f32.mrb[0].mxu0
    %v337 = vpop.f32.mrb[0].mxu0
    %v338 = vadd.f32 %v271, %v337
    %v339 = vpop.f32.mrb[0].mxu0
    %340 = vdwg.mxu0
    %vm341 = vcmask 130048
    %342 = vst.msk [vmem:[#allocation7] sm:$0xff] %vm341, %v335
    %343 = vst.msk [vmem:[#allocation7 + $0x8] sm:$0xff] %vm341, %v338
    // Predicated region
    $region34: #{tpu_custom_call.1} parent=1 // pred_check
      _
    $region35: #{tpu_custom_call.1} parent=1 // pred_check_branch
      %345 = sbr.rel (0) target = $region37
    $region36: #{tpu_custom_call.1} parent=1 // pred_region
      %s347 = ssub.s32 256, 256
      %348 = vsyncadd [#allocation6], %s347
      %s349 = sshll.u32 [#allocation7], 4
      %s350 = int_to_ptr.vmem [resolvable:$true] %s349
      %355 = dma.vmem_to_hbm [thread:$0]  %s350, 256, %s8, [#allocation6], 128, 128, 8
    $region37: #{tpu_custom_call.1} parent=1 // pred_fallthru
      _
    // Predicated region
    $region38: #{tpu_custom_call.1} parent=1 // pred_check
      _
    $region39: #{tpu_custom_call.1} parent=1 // pred_check_branch
      %357 = sbr.rel (0) target = $region41
    $region40: #{tpu_custom_call.1} parent=1 // pred_region
      %358 = dma.done [#allocation6], 256
    $region41: #{tpu_custom_call.1} parent=1 // pred_fallthru
      _
    %359 = vsyncpa [#allocation5], 1
    %360 = vsyncpa [#allocation6], 1

</llo_original>
